<compile_context>
chip_gen: v7x
topology: tpu7x:2x2x1
jax: 0.10.0
libtpu: 0.0.40
codegen_flags: <defaults>
</compile_context>

<pallas_src>
import functools

import jax
import jax.numpy as jnp
from jax.experimental import pallas as pl
from jax.experimental.pallas import tpu as pltpu


def _ffn_kernel(action_size,
                x_ref,
                w1_ref, b1_ref,
                w2_ref, b2_ref,
                w3_ref, b3_ref,
                wh_ref, bh_ref,
                head_ref):
    # x arrives in f32; cast to bf16 in-kernel (free VPU op) so every matmul
    # runs on the bf16 MXU path with f32 accumulation.
    x = x_ref[...].astype(jnp.bfloat16)                                # (B, A)

    # fc1 + relu
    h = jnp.dot(x, w1_ref[...], preferred_element_type=jnp.float32) + b1_ref[...]
    h = jnp.maximum(h, 0.0).astype(jnp.bfloat16)                       # (B, 128)

    # fc2 + relu
    h = jnp.dot(h, w2_ref[...], preferred_element_type=jnp.float32) + b2_ref[...]
    h = jnp.maximum(h, 0.0).astype(jnp.bfloat16)                       # (B, 512)

    # fc3 (no activation, matches the reference)
    h = jnp.dot(h, w3_ref[...], preferred_element_type=jnp.float32) + b3_ref[...]
    h = h.astype(jnp.bfloat16)                                         # (B, 128)

    # Fused policy + value head: columns [0, A) are pi logits, column A is v,
    # the remaining lanes are zero padding (weights/bias padded with zeros).
    logits = jnp.dot(h, wh_ref[...], preferred_element_type=jnp.float32) + bh_ref[...]

    # Softmax over the *batch* axis (dim=0), exactly as F.softmax(pi, dim=0).
    m = jnp.max(logits, axis=0, keepdims=True)
    e = jnp.exp(logits - m)
    s = jnp.sum(e, axis=0, keepdims=True)
    soft = e * pl.reciprocal(s, approx=False)                          # (B, Hp)
    th = jnp.tanh(logits)                                              # (B, Hp)

    # One lane-dense store: pi columns get softmax, everything else gets tanh
    # (column A is the real value head; padded columns are sliced off outside).
    col = jax.lax.broadcasted_iota(jnp.int32, logits.shape, 1)
    head_ref[...] = jnp.where(col < action_size, soft, th).astype(head_ref.dtype)


def prepare_params(raw, weight_dtype=jnp.bfloat16):
    """PyTorch layout (W:(out,in), b:(1,out)) -> kernel layout:
    W:(in,out) bf16, b:(1,out) f32, pi/v heads fused and lane-padded."""
    A = raw["wpi"].shape[0]
    head_pad = max(128, -(-(A + 1) // 128) * 128)

    def wt(w):
        return jnp.asarray(w).T.astype(weight_dtype)              # (in, out)

    def bias(b):
        return jnp.asarray(b, jnp.float32).reshape(1, -1)

    wh = jnp.concatenate([jnp.asarray(raw["wpi"]),
                          jnp.asarray(raw["wv"])], axis=0).T      # (128, A+1)
    wh = jnp.pad(wh, ((0, 0), (0, head_pad - (A + 1)))).astype(weight_dtype)
    bh = jnp.concatenate([jnp.asarray(raw["bpi"]).reshape(-1),
                          jnp.asarray(raw["bv"]).reshape(-1)])
    bh = jnp.pad(bh, (0, head_pad - (A + 1))).reshape(1, head_pad).astype(jnp.float32)

    return dict(w1=wt(raw["w1"]), b1=bias(raw["b1"]),
                w2=wt(raw["w2"]), b2=bias(raw["b2"]),
                w3=wt(raw["w3"]), b3=bias(raw["b3"]),
                wh=wh, bh=bh, action_size=A, head_pad=head_pad)


def neural_net_forward(x, p):
    """x: (B, action_size) float32. p: output of prepare_params."""
    B, A = x.shape
    head_pad = p["head_pad"]
    vmem = pl.BlockSpec(memory_space=pltpu.MemorySpace.VMEM)

    args = (x.astype(jnp.float32),
            p["w1"], p["b1"], p["w2"], p["b2"], p["w3"], p["b3"],
            p["wh"], p["bh"])

    flops = 2 * B * (A * 128 + 128 * 512 + 512 * 128 + 128 * head_pad)
    w_bytes = (A * 128 + 128 * 512 + 512 * 128 + 128 * head_pad) * 2
    b_bytes = (128 + 512 + 128 + head_pad) * 4
    io_bytes = B * A * 4 + B * head_pad * 4
    cost = pl.CostEstimate(flops=flops,
                           transcendentals=2 * B * head_pad,
                           bytes_accessed=w_bytes + b_bytes + io_bytes)

    head = pl.pallas_call(
        functools.partial(_ffn_kernel, A),
        out_shape=jax.ShapeDtypeStruct((B, head_pad), jnp.float32),
        in_specs=[vmem] * len(args),
        out_specs=vmem,
        cost_estimate=cost,
    )(*args)

    pi = head[:, :A]            # already softmaxed over dim=0
    v = head[:, A:A + 1]        # already tanh'd
    return pi, v


def init_params(key, action_size):
    """Deterministic synthetic parameters with PyTorch Linear shapes: W (out,in), b (1,out)."""
    ks = jax.random.split(key, 10)

    def lin(kw, kb, fan_in, fan_out):
        bound = 1.0 / jnp.sqrt(fan_in)
        w = jax.random.uniform(kw, (fan_out, fan_in), jnp.float32, -bound, bound)
        b = jax.random.uniform(kb, (1, fan_out), jnp.float32, -bound, bound)
        return w, b

    w1, b1 = lin(ks[0], ks[1], action_size, 128)
    w2, b2 = lin(ks[2], ks[3], 128, 512)
    w3, b3 = lin(ks[4], ks[5], 512, 128)
    wpi, bpi = lin(ks[6], ks[7], 128, action_size)
    wv, bv = lin(ks[8], ks[9], 128, 1)
    return dict(w1=w1, b1=b1, w2=w2, b2=b2, w3=w3, b3=b3,
                wpi=wpi, bpi=bpi, wv=wv, bv=bv)


def reference_forward(x, raw):
    """Pure-JAX reference mirroring the kernel numerics (bf16 storage, f32 accumulate)."""
    q = lambda a: jnp.asarray(a).astype(jnp.bfloat16).astype(jnp.float32)
    b = lambda a: jnp.asarray(a, jnp.float32).reshape(1, -1)
    h = jnp.maximum(q(x) @ q(raw["w1"].T) + b(raw["b1"]), 0.0)
    h = q(h)
    h = jnp.maximum(h @ q(raw["w2"].T) + b(raw["b2"]), 0.0)
    h = q(h)
    h = q(h @ q(raw["w3"].T) + b(raw["b3"]))
    logits_pi = h @ q(raw["wpi"].T) + b(raw["bpi"])
    logits_v = h @ q(raw["wv"].T) + b(raw["bv"])
    pi = jax.nn.softmax(logits_pi, axis=0)   # dim=0, as in the PyTorch module
    v = jnp.tanh(logits_v)
    return pi, v


if __name__ == "__main__":
    action_size = 8
    batch = 8    # small demo shape; production use should batch >= 256 states per call
    key = jax.random.PRNGKey(0)
    k_x, k_p = jax.random.split(key)

    x = jax.random.normal(k_x, (batch, action_size), jnp.float32)
    raw = init_params(k_p, action_size)
    params = prepare_params(raw)

    pi, v = neural_net_forward(x, params)
    jax.block_until_ready((pi, v))

    pi_ref, v_ref = reference_forward(x, raw)
    assert pi.shape == (batch, action_size) and v.shape == (batch, 1)
    assert jnp.allclose(pi, pi_ref, atol=1e-4, rtol=1e-4)
    assert jnp.allclose(v, v_ref, atol=1e-4, rtol=1e-4)
    assert jnp.allclose(jnp.sum(pi, axis=0), 1.0, atol=1e-4)  # softmax over dim=0

    print("KERNEL_OK")
</pallas_src>

<mosaic_0001>
module attributes {stable_mosaic.version = 11 : i64} {
  func.func @_ffn_kernel(%arg0: memref<8x8xf32, #tpu.memory_space<vmem>>, %arg1: memref<8x128xbf16, #tpu.memory_space<vmem>>, %arg2: memref<1x128xf32, #tpu.memory_space<vmem>>, %arg3: memref<128x512xbf16, #tpu.memory_space<vmem>>, %arg4: memref<1x512xf32, #tpu.memory_space<vmem>>, %arg5: memref<512x128xbf16, #tpu.memory_space<vmem>>, %arg6: memref<1x128xf32, #tpu.memory_space<vmem>>, %arg7: memref<128x128xbf16, #tpu.memory_space<vmem>>, %arg8: memref<1x128xf32, #tpu.memory_space<vmem>>, %arg9: memref<8x128xf32, #tpu.memory_space<vmem>>) attributes {dimension_semantics = [], scalar_prefetch = 0 : i64, scratch_operands = 0 : i64, tpu.core_type = #tpu.core_type<tc>} {
    %c0 = arith.constant 0 : index
    %c0_0 = arith.constant 0 : index
    %0 = vector.load %arg0[%c0, %c0_0] : memref<8x8xf32, #tpu.memory_space<vmem>>, vector<8x8xf32>
    %1 = arith.truncf %0 : vector<8x8xf32> to vector<8x8xbf16>
    %c0_1 = arith.constant 0 : index
    %c0_2 = arith.constant 0 : index
    %2 = vector.load %arg1[%c0_1, %c0_2] : memref<8x128xbf16, #tpu.memory_space<vmem>>, vector<8x128xbf16>
    %cst = arith.constant dense<0.000000e+00> : vector<8x128xf32>
    %3 = tpu.matmul %1, %2, %cst {dimension_numbers = #tpu.dot_dimension_numbers<[1], [0], [0], [1], [0, 0, 1, 1], [], []>} : vector<8x8xbf16>, vector<8x128xbf16>, vector<8x128xf32> -> vector<8x128xf32>
    %c0_3 = arith.constant 0 : index
    %c0_4 = arith.constant 0 : index
    %4 = vector.load %arg2[%c0_3, %c0_4] : memref<1x128xf32, #tpu.memory_space<vmem>>, vector<1x128xf32>
    %5 = vector.broadcast %4 : vector<1x128xf32> to vector<8x128xf32>
    %6 = arith.addf %3, %5 : vector<8x128xf32>
    %cst_5 = arith.constant 0.000000e+00 : f32
    %7 = vector.broadcast %cst_5 : f32 to vector<8x128xf32>
    %8 = arith.maximumf %6, %7 : vector<8x128xf32>
    %9 = arith.truncf %8 : vector<8x128xf32> to vector<8x128xbf16>
    %c0_6 = arith.constant 0 : index
    %c0_7 = arith.constant 0 : index
    %10 = vector.load %arg3[%c0_6, %c0_7] : memref<128x512xbf16, #tpu.memory_space<vmem>>, vector<128x512xbf16>
    %cst_8 = arith.constant dense<0.000000e+00> : vector<8x512xf32>
    %11 = tpu.matmul %9, %10, %cst_8 {dimension_numbers = #tpu.dot_dimension_numbers<[1], [0], [0], [1], [0, 0, 1, 1], [], []>} : vector<8x128xbf16>, vector<128x512xbf16>, vector<8x512xf32> -> vector<8x512xf32>
    %c0_9 = arith.constant 0 : index
    %c0_10 = arith.constant 0 : index
    %12 = vector.load %arg4[%c0_9, %c0_10] : memref<1x512xf32, #tpu.memory_space<vmem>>, vector<1x512xf32>
    %13 = vector.broadcast %12 : vector<1x512xf32> to vector<8x512xf32>
    %14 = arith.addf %11, %13 : vector<8x512xf32>
    %cst_11 = arith.constant 0.000000e+00 : f32
    %15 = vector.broadcast %cst_11 : f32 to vector<8x512xf32>
    %16 = arith.maximumf %14, %15 : vector<8x512xf32>
    %17 = arith.truncf %16 : vector<8x512xf32> to vector<8x512xbf16>
    %c0_12 = arith.constant 0 : index
    %c0_13 = arith.constant 0 : index
    %18 = vector.load %arg5[%c0_12, %c0_13] : memref<512x128xbf16, #tpu.memory_space<vmem>>, vector<512x128xbf16>
    %cst_14 = arith.constant dense<0.000000e+00> : vector<8x128xf32>
    %19 = tpu.matmul %17, %18, %cst_14 {dimension_numbers = #tpu.dot_dimension_numbers<[1], [0], [0], [1], [0, 0, 1, 1], [], []>} : vector<8x512xbf16>, vector<512x128xbf16>, vector<8x128xf32> -> vector<8x128xf32>
    %c0_15 = arith.constant 0 : index
    %c0_16 = arith.constant 0 : index
    %20 = vector.load %arg6[%c0_15, %c0_16] : memref<1x128xf32, #tpu.memory_space<vmem>>, vector<1x128xf32>
    %21 = vector.broadcast %20 : vector<1x128xf32> to vector<8x128xf32>
    %22 = arith.addf %19, %21 : vector<8x128xf32>
    %23 = arith.truncf %22 : vector<8x128xf32> to vector<8x128xbf16>
    %c0_17 = arith.constant 0 : index
    %c0_18 = arith.constant 0 : index
    %24 = vector.load %arg7[%c0_17, %c0_18] : memref<128x128xbf16, #tpu.memory_space<vmem>>, vector<128x128xbf16>
    %cst_19 = arith.constant dense<0.000000e+00> : vector<8x128xf32>
    %25 = tpu.matmul %23, %24, %cst_19 {dimension_numbers = #tpu.dot_dimension_numbers<[1], [0], [0], [1], [0, 0, 1, 1], [], []>} : vector<8x128xbf16>, vector<128x128xbf16>, vector<8x128xf32> -> vector<8x128xf32>
    %c0_20 = arith.constant 0 : index
    %c0_21 = arith.constant 0 : index
    %26 = vector.load %arg8[%c0_20, %c0_21] : memref<1x128xf32, #tpu.memory_space<vmem>>, vector<1x128xf32>
    %27 = vector.broadcast %26 : vector<1x128xf32> to vector<8x128xf32>
    %28 = arith.addf %25, %27 : vector<8x128xf32>
    %cst_22 = arith.constant dense<0xFF800000> : vector<128xf32>
    %29 = vector.multi_reduction <maximumf>, %28, %cst_22 [0] : vector<8x128xf32> to vector<128xf32>
    %30 = vector.shape_cast %29 : vector<128xf32> to vector<1x128xf32>
    %31 = vector.broadcast %30 : vector<1x128xf32> to vector<8x128xf32>
    %32 = arith.subf %28, %31 : vector<8x128xf32>
    %33 = math.exp %32 : vector<8x128xf32>
    %cst_23 = arith.constant dense<0.000000e+00> : vector<128xf32>
    %34 = vector.multi_reduction <add>, %33, %cst_23 [0] : vector<8x128xf32> to vector<128xf32>
    %35 = vector.shape_cast %34 : vector<128xf32> to vector<1x128xf32>
    %36 = tpu.reciprocal %35 : vector<1x128xf32> -> vector<1x128xf32>
    %37 = vector.broadcast %36 : vector<1x128xf32> to vector<8x128xf32>
    %38 = arith.mulf %33, %37 : vector<8x128xf32>
    %39 = math.tanh %28 : vector<8x128xf32>
    %40 = tpu.iota {dimensions = array<i32: 1>} : vector<8x128xi32>
    %c8_i32 = arith.constant 8 : i32
    %41 = vector.broadcast %c8_i32 : i32 to vector<8x128xi32>
    %42 = arith.cmpi slt, %40, %41 : vector<8x128xi32>
    %43 = arith.select %42, %38, %39 : vector<8x128xi1>, vector<8x128xf32>
    %c0_24 = arith.constant 0 : index
    %c0_25 = arith.constant 0 : index
    %44 = vector.load %arg9[%c0_24, %c0_25] : memref<8x128xf32, #tpu.memory_space<vmem>>, vector<8x128xf32>
    tpu.vector_store %arg9[%c0_24, %c0_25], %43 {strides = array<i32>} : memref<8x128xf32, #tpu.memory_space<vmem>>, vector<8x128xf32>,
    return
  }
}

</mosaic_0001>

<llo_original>
// kernel: tpu_custom_call.1
$region0: #{tpu_custom_call.1}
  #allocation0 [shape = 'u32[]', space=smem, size = 0x4, offset = 0x4, fixed_abs, tag = 'smem constant byte address 0x4 - core index']
  #allocation1 [shape = 'u32[144,128]{1,0:T(1,128)}', space=vmem, size = 0x12000, scoped, tag = 'internal scratch']
  %s0 = inlined_call_operand.hbm [shape: f32[8,8], index: 0, kind: input, shape index: {}]
  %s1 = inlined_call_operand.hbm [shape: bf16[8,128], index: 1, kind: input, shape index: {}]
  %s2 = inlined_call_operand.vmem [shape: f32[1,128], index: 2, kind: input, shape index: {}]
  %s3 = inlined_call_operand.hbm [shape: bf16[128,512], index: 3, kind: input, shape index: {}]
  %s4 = inlined_call_operand.vmem [shape: f32[1,512], index: 4, kind: input, shape index: {}]
  %s5 = inlined_call_operand.hbm [shape: bf16[512,128], index: 5, kind: input, shape index: {}]
  %s6 = inlined_call_operand.vmem [shape: f32[1,128], index: 6, kind: input, shape index: {}]
  %s7 = inlined_call_operand.hbm [shape: bf16[128,128], index: 7, kind: input, shape index: {}]
  %s8 = inlined_call_operand.vmem [shape: f32[1,128], index: 8, kind: input, shape index: {}]
  %s9 = inlined_call_operand.hbm [shape: f32[8,128], index: 9, kind: output, shape index: {}]
  %s10 = sld [smem:[#allocation0]]
  $region66: #{tpu_custom_call.1} parent=0
    _
  %s12 = ssub.s32 1, %s10
  %s13 = scalar_select 0, %s12, %s10
  $region1: #{tpu_custom_call.1} parent=0
    #allocation2 [shape = 'u8[4096]{0}', space=vmem, size = 0x1000, scoped, tag = 'input window, operand 0, single buffered']
    #allocation3 [shape = 's32[1]{0}', space=sflag, size = 0x4, scoped, tag = 'scoped memory for tpu_custom_call.1']
    #allocation4 [shape = 's32[1]{0}', space=sflag, size = 0x4, scoped, tag = 'scoped memory for tpu_custom_call.1']
    #allocation5 [shape = 'u8[2048]{0}', space=vmem, size = 0x800, scoped, tag = 'input window, operand 1, single buffered']
    #allocation6 [shape = 's32[1]{0}', space=sflag, size = 0x4, scoped, tag = 'scoped memory for tpu_custom_call.1']
    #allocation7 [shape = 'u8[131072]{0}', space=vmem, size = 0x20000, scoped, tag = 'input window, operand 3, single buffered']
    #allocation8 [shape = 'u8[131072]{0}', space=vmem, size = 0x20000, scoped, tag = 'input window, operand 5, single buffered']
    #allocation9 [shape = 's32[1]{0}', space=sflag, size = 0x4, scoped, tag = 'scoped memory for tpu_custom_call.1']
    #allocation10 [shape = 'u8[32768]{0}', space=vmem, size = 0x8000, scoped, tag = 'input window, operand 7, single buffered']
    #allocation11 [shape = 'u8[4096]{0}', space=vmem, size = 0x1000, scoped, tag = 'output window, operand 0, single buffered']
    %14 = vsyncpa [#allocation3], 0
    %15 = vsyncpa [#allocation6], 0
    %16 = vsyncpa [#allocation9], 0
    %17 = vsyncpa [#allocation4], 0
    // Predicated region
    $region2: #{tpu_custom_call.1} parent=1 // pred_check
      _
    $region3: #{tpu_custom_call.1} parent=1 // pred_check_branch
      %19 = sbr.rel (0) target = $region5
    $region4: #{tpu_custom_call.1} parent=1 // pred_region
      %s21 = ssub.s32 128, 128
      %22 = vsyncadd [#allocation3], %s21
      %s24 = sshll.u32 [#allocation2], 4
      %s25 = int_to_ptr.vmem [resolvable:$true] %s24
      %27 = dma.hbm_to_vmem [thread:$0]  %s0, 128, %s25, [#allocation3]
    $region5: #{tpu_custom_call.1} parent=1 // pred_fallthru
      _
    // Predicated region
    $region6: #{tpu_custom_call.1} parent=1 // pred_check
      _
    $region7: #{tpu_custom_call.1} parent=1 // pred_check_branch
      %29 = sbr.rel (0) target = $region9
    $region8: #{tpu_custom_call.1} parent=1 // pred_region
      %s31 = ssub.s32 64, 64
      %32 = vsyncadd [#allocation6], %s31
      %s34 = sshll.u32 [#allocation5], 4
      %s35 = int_to_ptr.vmem [resolvable:$true] %s34
      %37 = dma.hbm_to_vmem [thread:$0]  %s1, 64, %s35, [#allocation6]
    $region9: #{tpu_custom_call.1} parent=1 // pred_fallthru
      _
    // Predicated region
    $region10: #{tpu_custom_call.1} parent=1 // pred_check
      _
    $region11: #{tpu_custom_call.1} parent=1 // pred_check_branch
      %39 = sbr.rel (0) target = $region13
    $region12: #{tpu_custom_call.1} parent=1 // pred_region
      _
    $region13: #{tpu_custom_call.1} parent=1 // pred_fallthru
      _
    // Predicated region
    $region14: #{tpu_custom_call.1} parent=1 // pred_check
      _
    $region15: #{tpu_custom_call.1} parent=1 // pred_check_branch
      %41 = sbr.rel (0) target = $region17
    $region16: #{tpu_custom_call.1} parent=1 // pred_region
      %s43 = ssub.s32 4096, 4096
      %44 = vsyncadd [#allocation6], %s43
      %s45 = sshll.u32 [#allocation7], 4
      %s46 = int_to_ptr.vmem [resolvable:$true] %s45
      %51 = dma.hbm_to_vmem [thread:$0]  %s3, 4096, %s46, [#allocation6], 256, 256, 16
    $region17: #{tpu_custom_call.1} parent=1 // pred_fallthru
      _
    // Predicated region
    $region18: #{tpu_custom_call.1} parent=1 // pred_check
      _
    $region19: #{tpu_custom_call.1} parent=1 // pred_check_branch
      %53 = sbr.rel (0) target = $region21
    $region20: #{tpu_custom_call.1} parent=1 // pred_region
      _
    $region21: #{tpu_custom_call.1} parent=1 // pred_fallthru
      _
    // Predicated region
    $region22: #{tpu_custom_call.1} parent=1 // pred_check
      _
    $region23: #{tpu_custom_call.1} parent=1 // pred_check_branch
      %55 = sbr.rel (0) target = $region25
    $region24: #{tpu_custom_call.1} parent=1 // pred_region
      %s57 = ssub.s32 4096, 4096
      %58 = vsyncadd [#allocation9], %s57
      %s59 = sshll.u32 [#allocation8], 4
      %s60 = int_to_ptr.vmem [resolvable:$true] %s59
      %65 = dma.hbm_to_vmem [thread:$0]  %s5, 4096, %s60, [#allocation9], 64, 64, 4
    $region25: #{tpu_custom_call.1} parent=1 // pred_fallthru
      _
    // Predicated region
    $region26: #{tpu_custom_call.1} parent=1 // pred_check
      _
    $region27: #{tpu_custom_call.1} parent=1 // pred_check_branch
      %67 = sbr.rel (0) target = $region29
    $region28: #{tpu_custom_call.1} parent=1 // pred_region
      _
    $region29: #{tpu_custom_call.1} parent=1 // pred_fallthru
      _
    // Predicated region
    $region30: #{tpu_custom_call.1} parent=1 // pred_check
      _
    $region31: #{tpu_custom_call.1} parent=1 // pred_check_branch
      %69 = sbr.rel (0) target = $region33
    $region32: #{tpu_custom_call.1} parent=1 // pred_region
      %s71 = ssub.s32 1024, 1024
      %72 = vsyncadd [#allocation9], %s71
      %s73 = sshll.u32 [#allocation10], 4
      %s74 = int_to_ptr.vmem [resolvable:$true] %s73
      %79 = dma.hbm_to_vmem [thread:$0]  %s7, 1024, %s74, [#allocation9], 64, 64, 4
    $region33: #{tpu_custom_call.1} parent=1 // pred_fallthru
      _
    // Predicated region
    $region34: #{tpu_custom_call.1} parent=1 // pred_check
      _
    $region35: #{tpu_custom_call.1} parent=1 // pred_check_branch
      %81 = sbr.rel (0) target = $region37
    $region36: #{tpu_custom_call.1} parent=1 // pred_region
      _
    $region37: #{tpu_custom_call.1} parent=1 // pred_fallthru
      _
    // Predicated region
    $region38: #{tpu_custom_call.1} parent=1 // pred_check
      _
    $region39: #{tpu_custom_call.1} parent=1 // pred_check_branch
      %83 = sbr.rel (0) target = $region41
    $region40: #{tpu_custom_call.1} parent=1 // pred_region
      %84 = dma.done [#allocation3], 128
    $region41: #{tpu_custom_call.1} parent=1 // pred_fallthru
      _
    // Predicated region
    $region42: #{tpu_custom_call.1} parent=1 // pred_check
      _
    $region43: #{tpu_custom_call.1} parent=1 // pred_check_branch
      %86 = sbr.rel (0) target = $region45
    $region44: #{tpu_custom_call.1} parent=1 // pred_region
      %87 = dma.done [#allocation6], 64
    $region45: #{tpu_custom_call.1} parent=1 // pred_fallthru
      _
    // Predicated region
    $region46: #{tpu_custom_call.1} parent=1 // pred_check
      _
    $region47: #{tpu_custom_call.1} parent=1 // pred_check_branch
      %89 = sbr.rel (0) target = $region49
    $region48: #{tpu_custom_call.1} parent=1 // pred_region
      %90 = dma.done [#allocation6], 4096
    $region49: #{tpu_custom_call.1} parent=1 // pred_fallthru
      _
    // Predicated region
    $region50: #{tpu_custom_call.1} parent=1 // pred_check
      _
    $region51: #{tpu_custom_call.1} parent=1 // pred_check_branch
      %92 = sbr.rel (0) target = $region53
    $region52: #{tpu_custom_call.1} parent=1 // pred_region
      %93 = dma.done [#allocation9], 4096
    $region53: #{tpu_custom_call.1} parent=1 // pred_fallthru
      _
    // Predicated region
    $region54: #{tpu_custom_call.1} parent=1 // pred_check
      _
    $region55: #{tpu_custom_call.1} parent=1 // pred_check_branch
      %95 = sbr.rel (0) target = $region57
    $region56: #{tpu_custom_call.1} parent=1 // pred_region
      %96 = dma.done [#allocation9], 1024
    $region57: #{tpu_custom_call.1} parent=1 // pred_fallthru
      _
    %v98 = vld [vmem:[#allocation2] sm:$0xff]
    %v99 = vpack.c.bf16 %v98, %v98
    %v100 = vld [vmem:[#allocation5] sm:$0xf]
    %v101 = vld [vmem:[%s2] sm:$0x1]
    %v103 = vlaneseq
    %v104 = vshrl.u32 %v103, 7
    %v105 = vsub.s32 0, %v104
    %v106 = vrot.slane %v101, %v105
    %vm108 = vcmask 64512
    %v110 = vsel %vm108, %v99, 0
    %vm112 = vcmask 1043456
    %v114 = vsel %vm112, %v100, 0
    %116 = vmatprep.subr.bf16.mxu0 0
    %117 = vmatpush1.bf16.msra.mxu0 %v114
    %118 = vmatprep.subr.bf16.mxu0 0
    %119 = vmatpush1.bf16.msra.mxu0 0
    %120 = vmatprep.subr.bf16.mxu0 0
    %121 = vmatpush1.bf16.msra.mxu0 0
    %122 = vmatprep.subr.bf16.mxu0 0
    %123 = vmatpush1.bf16.msra.mxu0 0
    %124 = vmatprep.subr.bf16.mxu0 0
    %125 = vmatpush1.bf16.msra.mxu0 0
    %126 = vmatprep.subr.bf16.mxu0 0
    %127 = vmatpush1.bf16.msra.mxu0 0
    %128 = vmatprep.subr.bf16.mxu0 0
    %129 = vmatpush1.bf16.msra.mxu0 0
    %130 = vmatprep.subr.bf16.mxu0 0
    %131 = vmatpush1.bf16.msra.mxu0 0
    %132 = vmatprep.subr.bf16.mxu0 0
    %133 = vmatpush1.bf16.msra.mxu0 0
    %134 = vmatprep.subr.bf16.mxu0 0
    %135 = vmatpush1.bf16.msra.mxu0 0
    %136 = vmatprep.subr.bf16.mxu0 0
    %137 = vmatpush1.bf16.msra.mxu0 0
    %138 = vmatprep.subr.bf16.mxu0 0
    %139 = vmatpush1.bf16.msra.mxu0 0
    %140 = vmatprep.subr.bf16.mxu0 0
    %141 = vmatpush1.bf16.msra.mxu0 0
    %142 = vmatprep.subr.bf16.mxu0 0
    %143 = vmatpush1.bf16.msra.mxu0 0
    %144 = vmatprep.subr.bf16.mxu0 0
    %145 = vmatpush1.bf16.msra.mxu0 0
    %146 = vmatprep.subr.bf16.mxu0 0
    %147 = vmatpush1.bf16.msra.mxu0 0
    %148 = vmatprep.mubr.bf16.mxu0 0
    %149 = vmatmul.mubr.bf16.gmra.mrb[0].mxu0 %v110
    %v150 = vpop.f32.mrb[0].mxu0
    %v151 = vadd.f32 %v106, %v150
    %v152 = vpop.f32.mrb[0].mxu0
    %v153 = vpop.f32.mrb[0].mxu0
    %v154 = vpop.f32.mrb[0].mxu0
    %155 = vdwg.mxu0
    %v156 = vmax.f32 %v151, 0.0
    %v157 = vpack.c.bf16 %v156, %v156
    %v158 = vld [vmem:[#allocation7] sm:$0xff]
    %v159 = vld [vmem:[#allocation7 + $0x8] sm:$0xff]
    %v160 = vld [vmem:[#allocation7 + $0x10] sm:$0xff]
    %v161 = vld [vmem:[#allocation7 + $0x18] sm:$0xff]
    %v162 = vld [vmem:[#allocation7 + $0x20] sm:$0xff]
    %v163 = vld [vmem:[#allocation7 + $0x28] sm:$0xff]
    %v164 = vld [vmem:[#allocation7 + $0x30] sm:$0xff]
    %v165 = vld [vmem:[#allocation7 + $0x38] sm:$0xff]
    %v166 = vld [vmem:[#allocation7 + $0x40] sm:$0xff]
    %v167 = vld [vmem:[#allocation7 + $0x48] sm:$0xff]
    %v168 = vld [vmem:[#allocation7 + $0x50] sm:$0xff]
    %v169 = vld [vmem:[#allocation7 + $0x58] sm:$0xff]
    %v170 = vld [vmem:[#allocation7 + $0x60] sm:$0xff]
    %v171 = vld [vmem:[#allocation7 + $0x68] sm:$0xff]
    %v172 = vld [vmem:[#allocation7 + $0x70] sm:$0xff]
    %v173 = vld [vmem:[#allocation7 + $0x78] sm:$0xff]
    %v174 = vld [vmem:[#allocation7 + $0x80] sm:$0xff]
    %v175 = vld [vmem:[#allocation7 + $0x88] sm:$0xff]
    %v176 = vld [vmem:[#allocation7 + $0x90] sm:$0xff]
    %v177 = vld [vmem:[#allocation7 + $0x98] sm:$0xff]
    %v178 = vld [vmem:[#allocation7 + $0xa0] sm:$0xff]
    %v179 = vld [vmem:[#allocation7 + $0xa8] sm:$0xff]
    %v180 = vld [vmem:[#allocation7 + $0xb0] sm:$0xff]
    %v181 = vld [vmem:[#allocation7 + $0xb8] sm:$0xff]
    %v182 = vld [vmem:[#allocation7 + $0xc0] sm:$0xff]
    %v183 = vld [vmem:[#allocation7 + $0xc8] sm:$0xff]
    %v184 = vld [vmem:[#allocation7 + $0xd0] sm:$0xff]
    %v185 = vld [vmem:[#allocation7 + $0xd8] sm:$0xff]
    %v186 = vld [vmem:[#allocation7 + $0xe0] sm:$0xff]
    %v187 = vld [vmem:[#allocation7 + $0xe8] sm:$0xff]
    %v188 = vld [vmem:[#allocation7 + $0xf0] sm:$0xff]
    %v189 = vld [vmem:[#allocation7 + $0xf8] sm:$0xff]
    %v190 = vld [vmem:[%s4] sm:$0xf]
    %v192 = vlaneseq
    %v193 = vshrl.u32 %v192, 7
    %v194 = vsub.s32 0, %v193
    %v195 = vrot.slane %v190, %v194
    %v196 = vlaneseq
    %v197 = vshrl.u32 %v196, 7
    %v198 = vsub.s32 1, %v197
    %v199 = vrot.slane %v190, %v198
    %v200 = vlaneseq
    %v201 = vshrl.u32 %v200, 7
    %v202 = vsub.s32 2, %v201
    %v203 = vrot.slane %v190, %v202
    %v204 = vlaneseq
    %v205 = vshrl.u32 %v204, 7
    %v206 = vsub.s32 3, %v205
    %v207 = vrot.slane %v190, %v206
    %v244 = vunpack.c.l.b16 %v158
    %v245 = vunpack.c.h.b16 %v158
    %v246 = vunpack.c.l.b16 %v159
    %v247 = vunpack.c.h.b16 %v159
    %v248 = vunpack.c.l.b16 %v160
    %v249 = vunpack.c.h.b16 %v160
    %v250 = vunpack.c.l.b16 %v161
    %v251 = vunpack.c.h.b16 %v161
    %v252 = vunpack.c.l.b16 %v162
    %v253 = vunpack.c.h.b16 %v162
    %v254 = vunpack.c.l.b16 %v163
    %v255 = vunpack.c.h.b16 %v163
    %v256 = vunpack.c.l.b16 %v164
    %v257 = vunpack.c.h.b16 %v164
    %v258 = vunpack.c.l.b16 %v165
    %v259 = vunpack.c.h.b16 %v165
    %v260 = vunpack.c.l.b16 %v166
    %v261 = vunpack.c.h.b16 %v166
    %v262 = vunpack.c.l.b16 %v167
    %v263 = vunpack.c.h.b16 %v167
    %v264 = vunpack.c.l.b16 %v168
    %v265 = vunpack.c.h.b16 %v168
    %v266 = vunpack.c.l.b16 %v169
    %v267 = vunpack.c.h.b16 %v169
    %v268 = vunpack.c.l.b16 %v170
    %v269 = vunpack.c.h.b16 %v170
    %v270 = vunpack.c.l.b16 %v171
    %v271 = vunpack.c.h.b16 %v171
    %v272 = vunpack.c.l.b16 %v172
    %v273 = vunpack.c.h.b16 %v172
    %v274 = vunpack.c.l.b16 %v173
    %v275 = vunpack.c.h.b16 %v173
    %v276 = vunpack.c.l.b16 %v174
    %v277 = vunpack.c.h.b16 %v174
    %v278 = vunpack.c.l.b16 %v175
    %v279 = vunpack.c.h.b16 %v175
    %v280 = vunpack.c.l.b16 %v176
    %v281 = vunpack.c.h.b16 %v176
    %v282 = vunpack.c.l.b16 %v177
    %v283 = vunpack.c.h.b16 %v177
    %v284 = vunpack.c.l.b16 %v178
    %v285 = vunpack.c.h.b16 %v178
    %v286 = vunpack.c.l.b16 %v179
    %v287 = vunpack.c.h.b16 %v179
    %v288 = vunpack.c.l.b16 %v180
    %v289 = vunpack.c.h.b16 %v180
    %v290 = vunpack.c.l.b16 %v181
    %v291 = vunpack.c.h.b16 %v181
    %v292 = vunpack.c.l.b16 %v182
    %v293 = vunpack.c.h.b16 %v182
    %v294 = vunpack.c.l.b16 %v183
    %v295 = vunpack.c.h.b16 %v183
    %v296 = vunpack.c.l.b16 %v184
    %v297 = vunpack.c.h.b16 %v184
    %v298 = vunpack.c.l.b16 %v185
    %v299 = vunpack.c.h.b16 %v185
    %v300 = vunpack.c.l.b16 %v186
    %v301 = vunpack.c.h.b16 %v186
    %v302 = vunpack.c.l.b16 %v187
    %v303 = vunpack.c.h.b16 %v187
    %v304 = vunpack.c.l.b16 %v188
    %v305 = vunpack.c.h.b16 %v188
    %v306 = vunpack.c.l.b16 %v189
    %v307 = vunpack.c.h.b16 %v189
    %v308 = vpack.c.b16 %v248, %v244
    %v309 = vpack.c.b16 %v249, %v245
    %v310 = vpack.c.b16 %v250, %v246
    %v311 = vpack.c.b16 %v251, %v247
    %v312 = vpack.c.b16 %v256, %v252
    %v313 = vpack.c.b16 %v257, %v253
    %v314 = vpack.c.b16 %v258, %v254
    %v315 = vpack.c.b16 %v259, %v255
    %v316 = vpack.c.b16 %v264, %v260
    %v317 = vpack.c.b16 %v265, %v261
    %v318 = vpack.c.b16 %v266, %v262
    %v319 = vpack.c.b16 %v267, %v263
    %v320 = vpack.c.b16 %v272, %v268
    %v321 = vpack.c.b16 %v273, %v269
    %v322 = vpack.c.b16 %v274, %v270
    %v323 = vpack.c.b16 %v275, %v271
    %v324 = vpack.c.b16 %v280, %v276
    %v325 = vpack.c.b16 %v281, %v277
    %v326 = vpack.c.b16 %v282, %v278
    %v327 = vpack.c.b16 %v283, %v279
    %v328 = vpack.c.b16 %v288, %v284
    %v329 = vpack.c.b16 %v289, %v285
    %v330 = vpack.c.b16 %v290, %v286
    %v331 = vpack.c.b16 %v291, %v287
    %v332 = vpack.c.b16 %v296, %v292
    %v333 = vpack.c.b16 %v297, %v293
    %v334 = vpack.c.b16 %v298, %v294
    %v335 = vpack.c.b16 %v299, %v295
    %v336 = vpack.c.b16 %v304, %v300
    %v337 = vpack.c.b16 %v305, %v301
    %v338 = vpack.c.b16 %v306, %v302
    %v339 = vpack.c.b16 %v307, %v303
    %372 = vmatprep.subr.bf16.mxu0 %v309
    %373 = vmatpush1.bf16.msra.mxu0 %v308
    %374 = vmatprep.subr.bf16.mxu0 %v313
    %375 = vmatpush1.bf16.msra.mxu0 %v312
    %376 = vmatprep.subr.bf16.mxu0 %v317
    %377 = vmatpush1.bf16.msra.mxu0 %v316
    %378 = vmatprep.subr.bf16.mxu0 %v321
    %379 = vmatpush1.bf16.msra.mxu0 %v320
    %380 = vmatprep.subr.bf16.mxu0 %v325
    %381 = vmatpush1.bf16.msra.mxu0 %v324
    %382 = vmatprep.subr.bf16.mxu0 %v329
    %383 = vmatpush1.bf16.msra.mxu0 %v328
    %384 = vmatprep.subr.bf16.mxu0 %v333
    %385 = vmatpush1.bf16.msra.mxu0 %v332
    %386 = vmatprep.subr.bf16.mxu0 %v337
    %387 = vmatpush1.bf16.msra.mxu0 %v336
    %388 = vmatprep.subr.bf16.mxu0 0
    %389 = vmatpush1.bf16.msra.mxu0 0
    %390 = vmatprep.subr.bf16.mxu0 0
    %391 = vmatpush1.bf16.msra.mxu0 0
    %392 = vmatprep.subr.bf16.mxu0 0
    %393 = vmatpush1.bf16.msra.mxu0 0
    %394 = vmatprep.subr.bf16.mxu0 0
    %395 = vmatpush1.bf16.msra.mxu0 0
    %396 = vmatprep.subr.bf16.mxu0 0
    %397 = vmatpush1.bf16.msra.mxu0 0
    %398 = vmatprep.subr.bf16.mxu0 0
    %399 = vmatpush1.bf16.msra.mxu0 0
    %400 = vmatprep.subr.bf16.mxu0 0
    %401 = vmatpush1.bf16.msra.mxu0 0
    %402 = vmatprep.subr.bf16.mxu0 0
    %403 = vmatpush1.bf16.msra.mxu0 0
    %404 = vmatprep.mubr.bf16.mxu0 0
    %405 = vmatmul.mubr.bf16.gmra.mrb[0].mxu0 %v157
    %v406 = vpop.f32.mrb[0].mxu0
    %v407 = vadd.f32 %v195, %v406
    %v408 = vpop.f32.mrb[0].mxu0
    %v409 = vadd.f32 %v199, %v408
    %v410 = vpop.f32.mrb[0].mxu0
    %v411 = vpop.f32.mrb[0].mxu0
    %412 = vdwg.mxu0
    %413 = vmatprep.subr.bf16.mxu0 %v311
    %414 = vmatpush1.bf16.msra.mxu0 %v310
    %415 = vmatprep.subr.bf16.mxu0 %v315
    %416 = vmatpush1.bf16.msra.mxu0 %v314
    %417 = vmatprep.subr.bf16.mxu0 %v319
    %418 = vmatpush1.bf16.msra.mxu0 %v318
    %419 = vmatprep.subr.bf16.mxu0 %v323
    %420 = vmatpush1.bf16.msra.mxu0 %v322
    %421 = vmatprep.subr.bf16.mxu0 %v327
    %422 = vmatpush1.bf16.msra.mxu0 %v326
    %423 = vmatprep.subr.bf16.mxu0 %v331
    %424 = vmatpush1.bf16.msra.mxu0 %v330
    %425 = vmatprep.subr.bf16.mxu0 %v335
    %426 = vmatpush1.bf16.msra.mxu0 %v334
    %427 = vmatprep.subr.bf16.mxu0 %v339
    %428 = vmatpush1.bf16.msra.mxu0 %v338
    %429 = vmatprep.subr.bf16.mxu0 0
    %430 = vmatpush1.bf16.msra.mxu0 0
    %431 = vmatprep.subr.bf16.mxu0 0
    %432 = vmatpush1.bf16.msra.mxu0 0
    %433 = vmatprep.subr.bf16.mxu0 0
    %434 = vmatpush1.bf16.msra.mxu0 0
    %435 = vmatprep.subr.bf16.mxu0 0
    %436 = vmatpush1.bf16.msra.mxu0 0
    %437 = vmatprep.subr.bf16.mxu0 0
    %438 = vmatpush1.bf16.msra.mxu0 0
    %439 = vmatprep.subr.bf16.mxu0 0
    %440 = vmatpush1.bf16.msra.mxu0 0
    %441 = vmatprep.subr.bf16.mxu0 0
    %442 = vmatpush1.bf16.msra.mxu0 0
    %443 = vmatprep.subr.bf16.mxu0 0
    %444 = vmatpush1.bf16.msra.mxu0 0
    %445 = vmatprep.mubr.bf16.mxu0 0
    %446 = vmatmul.mubr.bf16.gmra.mrb[0].mxu0 %v157
    %v447 = vpop.f32.mrb[0].mxu0
    %v448 = vadd.f32 %v203, %v447
    %v449 = vpop.f32.mrb[0].mxu0
    %v450 = vadd.f32 %v207, %v449
    %v451 = vpop.f32.mrb[0].mxu0
    %v452 = vpop.f32.mrb[0].mxu0
    %453 = vdwg.mxu0
    %v454 = vmax.f32 %v407, 0.0
    %v455 = vmax.f32 %v409, 0.0
    %v456 = vmax.f32 %v448, 0.0
    %v457 = vmax.f32 %v450, 0.0
    %v458 = vpack.c.bf16 %v454, %v454
    %v459 = vpack.c.bf16 %v455, %v455
    %v460 = vpack.c.bf16 %v456, %v456
    %v461 = vpack.c.bf16 %v457, %v457
    %v462 = vld [vmem:[#allocation8] sm:$0xf]
    %v463 = vld [vmem:[#allocation8 + $0x4] sm:$0xf]
    %v464 = vld [vmem:[#allocation8 + $0x8] sm:$0xf]
    %v465 = vld [vmem:[#allocation8 + $0xc] sm:$0xf]
    %v466 = vld [vmem:[#allocation8 + $0x10] sm:$0xf]
    %v467 = vld [vmem:[#allocation8 + $0x14] sm:$0xf]
    %v468 = vld [vmem:[#allocation8 + $0x18] sm:$0xf]
    %v469 = vld [vmem:[#allocation8 + $0x1c] sm:$0xf]
    %v470 = vld [vmem:[#allocation8 + $0x20] sm:$0xf]
    %v471 = vld [vmem:[#allocation8 + $0x24] sm:$0xf]
    %v472 = vld [vmem:[#allocation8 + $0x28] sm:$0xf]
    %v473 = vld [vmem:[#allocation8 + $0x2c] sm:$0xf]
    %v474 = vld [vmem:[#allocation8 + $0x30] sm:$0xf]
    %v475 = vld [vmem:[#allocation8 + $0x34] sm:$0xf]
    %v476 = vld [vmem:[#allocation8 + $0x38] sm:$0xf]
    %v477 = vld [vmem:[#allocation8 + $0x3c] sm:$0xf]
    %v478 = vld [vmem:[#allocation8 + $0x40] sm:$0xf]
    %v479 = vld [vmem:[#allocation8 + $0x44] sm:$0xf]
    %v480 = vld [vmem:[#allocation8 + $0x48] sm:$0xf]
    %v481 = vld [vmem:[#allocation8 + $0x4c] sm:$0xf]
    %v482 = vld [vmem:[#allocation8 + $0x50] sm:$0xf]
    %v483 = vld [vmem:[#allocation8 + $0x54] sm:$0xf]
    %v484 = vld [vmem:[#allocation8 + $0x58] sm:$0xf]
    %v485 = vld [vmem:[#allocation8 + $0x5c] sm:$0xf]
    %v486 = vld [vmem:[#allocation8 + $0x60] sm:$0xf]
    %v487 = vld [vmem:[#allocation8 + $0x64] sm:$0xf]
    %v488 = vld [vmem:[#allocation8 + $0x68] sm:$0xf]
    %v489 = vld [vmem:[#allocation8 + $0x6c] sm:$0xf]
    %v490 = vld [vmem:[#allocation8 + $0x70] sm:$0xf]
    %v491 = vld [vmem:[#allocation8 + $0x74] sm:$0xf]
    %v492 = vld [vmem:[#allocation8 + $0x78] sm:$0xf]
    %v493 = vld [vmem:[#allocation8 + $0x7c] sm:$0xf]
    %v494 = vld [vmem:[#allocation8 + $0x80] sm:$0xf]
    %v495 = vld [vmem:[#allocation8 + $0x84] sm:$0xf]
    %v496 = vld [vmem:[#allocation8 + $0x88] sm:$0xf]
    %v497 = vld [vmem:[#allocation8 + $0x8c] sm:$0xf]
    %v498 = vld [vmem:[#allocation8 + $0x90] sm:$0xf]
    %v499 = vld [vmem:[#allocation8 + $0x94] sm:$0xf]
    %v500 = vld [vmem:[#allocation8 + $0x98] sm:$0xf]
    %v501 = vld [vmem:[#allocation8 + $0x9c] sm:$0xf]
    %v502 = vld [vmem:[#allocation8 + $0xa0] sm:$0xf]
    %v503 = vld [vmem:[#allocation8 + $0xa4] sm:$0xf]
    %v504 = vld [vmem:[#allocation8 + $0xa8] sm:$0xf]
    %v505 = vld [vmem:[#allocation8 + $0xac] sm:$0xf]
    %v506 = vld [vmem:[#allocation8 + $0xb0] sm:$0xf]
    %v507 = vld [vmem:[#allocation8 + $0xb4] sm:$0xf]
    %v508 = vld [vmem:[#allocation8 + $0xb8] sm:$0xf]
    %v509 = vld [vmem:[#allocation8 + $0xbc] sm:$0xf]
    %v510 = vld [vmem:[#allocation8 + $0xc0] sm:$0xf]
    %v511 = vld [vmem:[#allocation8 + $0xc4] sm:$0xf]
    %v512 = vld [vmem:[#allocation8 + $0xc8] sm:$0xf]
    %v513 = vld [vmem:[#allocation8 + $0xcc] sm:$0xf]
    %v514 = vld [vmem:[#allocation8 + $0xd0] sm:$0xf]
    %v515 = vld [vmem:[#allocation8 + $0xd4] sm:$0xf]
    %v516 = vld [vmem:[#allocation8 + $0xd8] sm:$0xf]
    %v517 = vld [vmem:[#allocation8 + $0xdc] sm:$0xf]
    %v518 = vld [vmem:[#allocation8 + $0xe0] sm:$0xf]
    %v519 = vld [vmem:[#allocation8 + $0xe4] sm:$0xf]
    %v520 = vld [vmem:[#allocation8 + $0xe8] sm:$0xf]
    %v521 = vld [vmem:[#allocation8 + $0xec] sm:$0xf]
    %v522 = vld [vmem:[#allocation8 + $0xf0] sm:$0xf]
    %v523 = vld [vmem:[#allocation8 + $0xf4] sm:$0xf]
    %v524 = vld [vmem:[#allocation8 + $0xf8] sm:$0xf]
    %v525 = vld [vmem:[#allocation8 + $0xfc] sm:$0xf]
    %v526 = vld [vmem:[%s6] sm:$0x1]
    %v528 = vlaneseq
    %v529 = vshrl.u32 %v528, 7
    %v530 = vsub.s32 0, %v529
    %v531 = vrot.slane %v526, %v530
    %v597 = vunpack.c.l.b16 %v462
    %v598 = vunpack.c.l.b16 %v463
    %v599 = vunpack.c.l.b16 %v464
    %v600 = vunpack.c.l.b16 %v465
    %v601 = vunpack.c.l.b16 %v466
    %v602 = vunpack.c.l.b16 %v467
    %v603 = vunpack.c.l.b16 %v468
    %v604 = vunpack.c.l.b16 %v469
    %v605 = vunpack.c.l.b16 %v470
    %v606 = vunpack.c.l.b16 %v471
    %v607 = vunpack.c.l.b16 %v472
    %v608 = vunpack.c.l.b16 %v473
    %v609 = vunpack.c.l.b16 %v474
    %v610 = vunpack.c.l.b16 %v475
    %v611 = vunpack.c.l.b16 %v476
    %v612 = vunpack.c.l.b16 %v477
    %v613 = vunpack.c.l.b16 %v478
    %v614 = vunpack.c.l.b16 %v479
    %v615 = vunpack.c.l.b16 %v480
    %v616 = vunpack.c.l.b16 %v481
    %v617 = vunpack.c.l.b16 %v482
    %v618 = vunpack.c.l.b16 %v483
    %v619 = vunpack.c.l.b16 %v484
    %v620 = vunpack.c.l.b16 %v485
    %v621 = vunpack.c.l.b16 %v486
    %v622 = vunpack.c.l.b16 %v487
    %v623 = vunpack.c.l.b16 %v488
    %v624 = vunpack.c.l.b16 %v489
    %v625 = vunpack.c.l.b16 %v490
    %v626 = vunpack.c.l.b16 %v491
    %v627 = vunpack.c.l.b16 %v492
    %v628 = vunpack.c.l.b16 %v493
    %v629 = vunpack.c.l.b16 %v494
    %v630 = vunpack.c.l.b16 %v495
    %v631 = vunpack.c.l.b16 %v496
    %v632 = vunpack.c.l.b16 %v497
    %v633 = vunpack.c.l.b16 %v498
    %v634 = vunpack.c.l.b16 %v499
    %v635 = vunpack.c.l.b16 %v500
    %v636 = vunpack.c.l.b16 %v501
    %v637 = vunpack.c.l.b16 %v502
    %v638 = vunpack.c.l.b16 %v503
    %v639 = vunpack.c.l.b16 %v504
    %v640 = vunpack.c.l.b16 %v505
    %v641 = vunpack.c.l.b16 %v506
    %v642 = vunpack.c.l.b16 %v507
    %v643 = vunpack.c.l.b16 %v508
    %v644 = vunpack.c.l.b16 %v509
    %v645 = vunpack.c.l.b16 %v510
    %v646 = vunpack.c.l.b16 %v511
    %v647 = vunpack.c.l.b16 %v512
    %v648 = vunpack.c.l.b16 %v513
    %v649 = vunpack.c.l.b16 %v514
    %v650 = vunpack.c.l.b16 %v515
    %v651 = vunpack.c.l.b16 %v516
    %v652 = vunpack.c.l.b16 %v517
    %v653 = vunpack.c.l.b16 %v518
    %v654 = vunpack.c.l.b16 %v519
    %v655 = vunpack.c.l.b16 %v520
    %v656 = vunpack.c.l.b16 %v521
    %v657 = vunpack.c.l.b16 %v522
    %v658 = vunpack.c.l.b16 %v523
    %v659 = vunpack.c.l.b16 %v524
    %v660 = vunpack.c.l.b16 %v525
    %v661 = vpack.c.b16 %v598, %v597
    %v662 = vpack.c.b16 %v600, %v599
    %v663 = vpack.c.b16 %v602, %v601
    %v664 = vpack.c.b16 %v604, %v603
    %v665 = vpack.c.b16 %v606, %v605
    %v666 = vpack.c.b16 %v608, %v607
    %v667 = vpack.c.b16 %v610, %v609
    %v668 = vpack.c.b16 %v612, %v611
    %v669 = vpack.c.b16 %v614, %v613
    %v670 = vpack.c.b16 %v616, %v615
    %v671 = vpack.c.b16 %v618, %v617
    %v672 = vpack.c.b16 %v620, %v619
    %v673 = vpack.c.b16 %v622, %v621
    %v674 = vpack.c.b16 %v624, %v623
    %v675 = vpack.c.b16 %v626, %v625
    %v676 = vpack.c.b16 %v628, %v627
    %v677 = vpack.c.b16 %v630, %v629
    %v678 = vpack.c.b16 %v632, %v631
    %v679 = vpack.c.b16 %v634, %v633
    %v680 = vpack.c.b16 %v636, %v635
    %v681 = vpack.c.b16 %v638, %v637
    %v682 = vpack.c.b16 %v640, %v639
    %v683 = vpack.c.b16 %v642, %v641
    %v684 = vpack.c.b16 %v644, %v643
    %v685 = vpack.c.b16 %v646, %v645
    %v686 = vpack.c.b16 %v648, %v647
    %v687 = vpack.c.b16 %v650, %v649
    %v688 = vpack.c.b16 %v652, %v651
    %v689 = vpack.c.b16 %v654, %v653
    %v690 = vpack.c.b16 %v656, %v655
    %v691 = vpack.c.b16 %v658, %v657
    %v692 = vpack.c.b16 %v660, %v659
    %725 = vmatprep.subr.bf16.mxu0 0
    %726 = vmatpush1.bf16.msra.mxu0 %v661
    %727 = vmatprep.subr.bf16.mxu0 0
    %728 = vmatpush1.bf16.msra.mxu0 %v662
    %729 = vmatprep.subr.bf16.mxu0 0
    %730 = vmatpush1.bf16.msra.mxu0 %v663
    %731 = vmatprep.subr.bf16.mxu0 0
    %732 = vmatpush1.bf16.msra.mxu0 %v664
    %733 = vmatprep.subr.bf16.mxu0 0
    %734 = vmatpush1.bf16.msra.mxu0 %v665
    %735 = vmatprep.subr.bf16.mxu0 0
    %736 = vmatpush1.bf16.msra.mxu0 %v666
    %737 = vmatprep.subr.bf16.mxu0 0
    %738 = vmatpush1.bf16.msra.mxu0 %v667
    %739 = vmatprep.subr.bf16.mxu0 0
    %740 = vmatpush1.bf16.msra.mxu0 %v668
    %741 = vmatprep.subr.bf16.mxu0 0
    %742 = vmatpush1.bf16.msra.mxu0 %v669
    %743 = vmatprep.subr.bf16.mxu0 0
    %744 = vmatpush1.bf16.msra.mxu0 %v670
    %745 = vmatprep.subr.bf16.mxu0 0
    %746 = vmatpush1.bf16.msra.mxu0 %v671
    %747 = vmatprep.subr.bf16.mxu0 0
    %748 = vmatpush1.bf16.msra.mxu0 %v672
    %749 = vmatprep.subr.bf16.mxu0 0
    %750 = vmatpush1.bf16.msra.mxu0 %v673
    %751 = vmatprep.subr.bf16.mxu0 0
    %752 = vmatpush1.bf16.msra.mxu0 %v674
    %753 = vmatprep.subr.bf16.mxu0 0
    %754 = vmatpush1.bf16.msra.mxu0 %v675
    %755 = vmatprep.subr.bf16.mxu0 0
    %756 = vmatpush1.bf16.msra.mxu0 %v676
    %757 = vmatprep.mubr.bf16.mxu0 %v459
    %758 = vmatmul.mubr.bf16.gmra.mrb[0].mxu0 %v458
    %v759 = vpop.f32.mrb[0].mxu0
    %v760 = vadd.f32 %v531, %v759
    %v761 = vpop.f32.mrb[0].mxu0
    %v762 = vpop.f32.mrb[0].mxu0
    %v763 = vpop.f32.mrb[0].mxu0
    %764 = vdwg.mxu0
    %765 = vmatprep.subr.bf16.mxu0 0
    %766 = vmatpush1.bf16.msra.mxu0 %v677
    %767 = vmatprep.subr.bf16.mxu0 0
    %768 = vmatpush1.bf16.msra.mxu0 %v678
    %769 = vmatprep.subr.bf16.mxu0 0
    %770 = vmatpush1.bf16.msra.mxu0 %v679
    %771 = vmatprep.subr.bf16.mxu0 0
    %772 = vmatpush1.bf16.msra.mxu0 %v680
    %773 = vmatprep.subr.bf16.mxu0 0
    %774 = vmatpush1.bf16.msra.mxu0 %v681
    %775 = vmatprep.subr.bf16.mxu0 0
    %776 = vmatpush1.bf16.msra.mxu0 %v682
    %777 = vmatprep.subr.bf16.mxu0 0
    %778 = vmatpush1.bf16.msra.mxu0 %v683
    %779 = vmatprep.subr.bf16.mxu0 0
    %780 = vmatpush1.bf16.msra.mxu0 %v684
    %781 = vmatprep.subr.bf16.mxu0 0
    %782 = vmatpush1.bf16.msra.mxu0 %v685
    %783 = vmatprep.subr.bf16.mxu0 0
    %784 = vmatpush1.bf16.msra.mxu0 %v686
    %785 = vmatprep.subr.bf16.mxu0 0
    %786 = vmatpush1.bf16.msra.mxu0 %v687
    %787 = vmatprep.subr.bf16.mxu0 0
    %788 = vmatpush1.bf16.msra.mxu0 %v688
    %789 = vmatprep.subr.bf16.mxu0 0
    %790 = vmatpush1.bf16.msra.mxu0 %v689
    %791 = vmatprep.subr.bf16.mxu0 0
    %792 = vmatpush1.bf16.msra.mxu0 %v690
    %793 = vmatprep.subr.bf16.mxu0 0
    %794 = vmatpush1.bf16.msra.mxu0 %v691
    %795 = vmatprep.subr.bf16.mxu0 0
    %796 = vmatpush1.bf16.msra.mxu0 %v692
    %797 = vmatprep.mubr.bf16.mxu0 %v461
    %798 = vmatmul.mubr.bf16.gmra.mrb[0].mxu0 %v460
    %v799 = vpop.f32.mrb[0].mxu0
    %v800 = vadd.f32 %v760, %v799
    %v801 = vpop.f32.mrb[0].mxu0
    %v802 = vpop.f32.mrb[0].mxu0
    %v803 = vpop.f32.mrb[0].mxu0
    %804 = vdwg.mxu0
    %v805 = vpack.c.bf16 %v800, %v800
    %v806 = vld [vmem:[#allocation10] sm:$0xf]
    %v807 = vld [vmem:[#allocation10 + $0x4] sm:$0xf]
    %v808 = vld [vmem:[#allocation10 + $0x8] sm:$0xf]
    %v809 = vld [vmem:[#allocation10 + $0xc] sm:$0xf]
    %v810 = vld [vmem:[#allocation10 + $0x10] sm:$0xf]
    %v811 = vld [vmem:[#allocation10 + $0x14] sm:$0xf]
    %v812 = vld [vmem:[#allocation10 + $0x18] sm:$0xf]
    %v813 = vld [vmem:[#allocation10 + $0x1c] sm:$0xf]
    %v814 = vld [vmem:[#allocation10 + $0x20] sm:$0xf]
    %v815 = vld [vmem:[#allocation10 + $0x24] sm:$0xf]
    %v816 = vld [vmem:[#allocation10 + $0x28] sm:$0xf]
    %v817 = vld [vmem:[#allocation10 + $0x2c] sm:$0xf]
    %v818 = vld [vmem:[#allocation10 + $0x30] sm:$0xf]
    %v819 = vld [vmem:[#allocation10 + $0x34] sm:$0xf]
    %v820 = vld [vmem:[#allocation10 + $0x38] sm:$0xf]
    %v821 = vld [vmem:[#allocation10 + $0x3c] sm:$0xf]
    %v822 = vld [vmem:[%s8] sm:$0x1]
    %v824 = vlaneseq
    %v825 = vshrl.u32 %v824, 7
    %v826 = vsub.s32 0, %v825
    %v827 = vrot.slane %v822, %v826
    %v845 = vunpack.c.l.b16 %v806
    %v846 = vunpack.c.l.b16 %v807
    %v847 = vunpack.c.l.b16 %v808
    %v848 = vunpack.c.l.b16 %v809
    %v849 = vunpack.c.l.b16 %v810
    %v850 = vunpack.c.l.b16 %v811
    %v851 = vunpack.c.l.b16 %v812
    %v852 = vunpack.c.l.b16 %v813
    %v853 = vunpack.c.l.b16 %v814
    %v854 = vunpack.c.l.b16 %v815
    %v855 = vunpack.c.l.b16 %v816
    %v856 = vunpack.c.l.b16 %v817
    %v857 = vunpack.c.l.b16 %v818
    %v858 = vunpack.c.l.b16 %v819
    %v859 = vunpack.c.l.b16 %v820
    %v860 = vunpack.c.l.b16 %v821
    %v861 = vpack.c.b16 %v846, %v845
    %v862 = vpack.c.b16 %v848, %v847
    %v863 = vpack.c.b16 %v850, %v849
    %v864 = vpack.c.b16 %v852, %v851
    %v865 = vpack.c.b16 %v854, %v853
    %v866 = vpack.c.b16 %v856, %v855
    %v867 = vpack.c.b16 %v858, %v857
    %v868 = vpack.c.b16 %v860, %v859
    %877 = vmatprep.subr.bf16.mxu0 0
    %878 = vmatpush1.bf16.msra.mxu0 %v861
    %879 = vmatprep.subr.bf16.mxu0 0
    %880 = vmatpush1.bf16.msra.mxu0 %v862
    %881 = vmatprep.subr.bf16.mxu0 0
    %882 = vmatpush1.bf16.msra.mxu0 %v863
    %883 = vmatprep.subr.bf16.mxu0 0
    %884 = vmatpush1.bf16.msra.mxu0 %v864
    %885 = vmatprep.subr.bf16.mxu0 0
    %886 = vmatpush1.bf16.msra.mxu0 %v865
    %887 = vmatprep.subr.bf16.mxu0 0
    %888 = vmatpush1.bf16.msra.mxu0 %v866
    %889 = vmatprep.subr.bf16.mxu0 0
    %890 = vmatpush1.bf16.msra.mxu0 %v867
    %891 = vmatprep.subr.bf16.mxu0 0
    %892 = vmatpush1.bf16.msra.mxu0 %v868
    %893 = vmatprep.subr.bf16.mxu0 0
    %894 = vmatpush1.bf16.msra.mxu0 0
    %895 = vmatprep.subr.bf16.mxu0 0
    %896 = vmatpush1.bf16.msra.mxu0 0
    %897 = vmatprep.subr.bf16.mxu0 0
    %898 = vmatpush1.bf16.msra.mxu0 0
    %899 = vmatprep.subr.bf16.mxu0 0
    %900 = vmatpush1.bf16.msra.mxu0 0
    %901 = vmatprep.subr.bf16.mxu0 0
    %902 = vmatpush1.bf16.msra.mxu0 0
    %903 = vmatprep.subr.bf16.mxu0 0
    %904 = vmatpush1.bf16.msra.mxu0 0
    %905 = vmatprep.subr.bf16.mxu0 0
    %906 = vmatpush1.bf16.msra.mxu0 0
    %907 = vmatprep.subr.bf16.mxu0 0
    %908 = vmatpush1.bf16.msra.mxu0 0
    %909 = vmatprep.mubr.bf16.mxu0 0
    %910 = vmatmul.mubr.bf16.gmra.mrb[0].mxu0 %v805
    %v911 = vpop.f32.mrb[0].mxu0
    %v912 = vadd.f32 %v827, %v911
    %v913 = vpop.f32.mrb[0].mxu0
    %v914 = vpop.f32.mrb[0].mxu0
    %v915 = vpop.f32.mrb[0].mxu0
    %916 = vdwg.mxu0
    %v917 = vrot.slane %v912, 4
    %v918 = vmax.f32 %v912, %v917
    %v919 = vrot.slane %v918, 2
    %v920 = vmax.f32 %v918, %v919
    %v921 = vrot.slane %v920, 1
    %v922 = vmax.f32 %v920, %v921
    %v923 = vsub.f32 %v912, %v922
    %v924 = vmul.f32 %v923, 1.442695
    %v925 = vpow.pop %v924
    %v926 = vrot.slane %v925, 4
    %v927 = vadd.f32 %v925, %v926
    %v928 = vrot.slane %v927, 2
    %v929 = vadd.f32 %v927, %v928
    %v930 = vrot.slane %v929, 1
    %v931 = vadd.f32 %v929, %v930
    %v932 = vrcp.pop %v931
    %v933 = vmul.f32 %v925, %v932
    %v934 = vtanh.pop %v912
    %v935 = vlaneseq
    %v936 = vand.u32 %v935, 127
    %vm937 = vcmp.lt.s32.totalorder %v936, 8
    %v938 = vsel %vm937, %v933, %v934
    %939 = vst [vmem:[#allocation11] sm:$0xff] %v938
    // Predicated region
    $region58: #{tpu_custom_call.1} parent=1 // pred_check
      _
    $region59: #{tpu_custom_call.1} parent=1 // pred_check_branch
      %941 = sbr.rel (0) target = $region61
    $region60: #{tpu_custom_call.1} parent=1 // pred_region
      %s943 = ssub.s32 128, 128
      %944 = vsyncadd [#allocation4], %s943
      %s946 = sshll.u32 [#allocation11], 4
      %s947 = int_to_ptr.vmem [resolvable:$true] %s946
      %949 = dma.vmem_to_hbm [thread:$0]  %s947, 128, %s9, [#allocation4]
    $region61: #{tpu_custom_call.1} parent=1 // pred_fallthru
      _
    // Predicated region
    $region62: #{tpu_custom_call.1} parent=1 // pred_check
      _
    $region63: #{tpu_custom_call.1} parent=1 // pred_check_branch
      %951 = sbr.rel (0) target = $region65
    $region64: #{tpu_custom_call.1} parent=1 // pred_region
      %952 = dma.done [#allocation4], 128
    $region65: #{tpu_custom_call.1} parent=1 // pred_fallthru
      _
    %953 = vsyncpa [#allocation3], 1
    %954 = vsyncpa [#allocation6], 1
    %955 = vsyncpa [#allocation9], 1
    %956 = vsyncpa [#allocation4], 1

</llo_original>
